<compile_context>
chip_gen: v5e
topology: v5e:2x2
jax: 0.10.0
libtpu: 0.0.40
codegen_flags: <defaults>
</compile_context>

<pallas_src>
import functools

import jax
import jax.numpy as jnp
import numpy as np
from jax.experimental import pallas as pl
from jax.experimental.pallas import tpu as pltpu


# ----------------------------- Pallas kernel --------------------------------

def _attention_gate_kernel(p_ref, m_ref, v_ref,
                           wp_ref, wm_ref, wv_ref,
                           b12_ref, wpsi_ref, bpsi_ref, bpo_ref,
                           out_ref, *, F_int, sub):
    T = p_ref.shape[-1]          # static lane-tile width of this block
    n_sub = T // sub             # static number of in-kernel sub-slices

    # Small fused weights: loaded once per grid step, held resident.
    wp = wp_ref[...]             # (F_int, F_p)            -> g1
    wm = wm_ref[...]             # (2*F_int + F_v, F_m)    rows: [x1 | g2 | po_m]
    wv = wv_ref[...]             # (F_int + F_v, F_v)      rows: [x2 | po_v]
    b1 = b12_ref[:F_int, :]      # bg1 + bx1   (F_int, 1)
    b2 = b12_ref[F_int:, :]      # bg2 + bx2   (F_int, 1)
    wpsi = wpsi_ref[...]         # (F_int, 2)  columns: [psi1 | psi2]
    bpsi = bpsi_ref[...]         # (2, 1)
    bpo = bpo_ref[...]           # (F_v, 1)

    def compute(pb, mb, vb):
        # one MXU matmul per input tensor
        yp = jnp.dot(wp, pb, preferred_element_type=jnp.float32)   # (F_int, s)
        ym = jnp.dot(wm, mb, preferred_element_type=jnp.float32)   # (2F_int+F_v, s)
        yv = jnp.dot(wv, vb, preferred_element_type=jnp.float32)   # (F_int+F_v, s)

        a1 = jnp.maximum(yp + ym[:F_int, :] + b1, 0.0)              # relu(g1+x1)
        a2 = jnp.maximum(ym[F_int:2 * F_int, :] + yv[:F_int, :] + b2, 0.0)

        # psi: Conv(F_int -> 1) as VPU mul + sublane reduce, then sigmoid.
        # (full-precision reciprocal; approx EUP vrcp skipped to keep 1e-5 tol)
        l1 = jnp.sum(a1 * wpsi[:, 0:1], axis=0, keepdims=True) + bpsi[0:1, :]
        l2 = jnp.sum(a2 * wpsi[:, 1:2], axis=0, keepdims=True) + bpsi[1:2, :]
        psi1 = 1.0 / (1.0 + jnp.exp(-l1))                           # (1, s)
        psi2 = 1.0 / (1.0 + jnp.exp(-l2))                           # (1, s)

        # psi factored out of the po projection (exact identity):
        #   wpom @ (m*psi1) == (wpom @ m) * psi1   since psi1 is per-lane.
        return ym[2 * F_int:, :] * psi1 + yv[F_int:, :] * psi2 + bpo

    if n_sub <= 1:
        out_ref[...] = compute(p_ref[...], m_ref[...],
                               v_ref[...]).astype(out_ref.dtype)
    else:
        def body(i, carry):
            off = pl.multiple_of(i * sub, 128)
            sl = pl.ds(off, sub)
            out_ref[:, sl] = compute(p_ref[:, sl], m_ref[:, sl],
                                     v_ref[:, sl]).astype(out_ref.dtype)
            return carry
        jax.lax.fori_loop(0, n_sub, body, 0, unroll=min(n_sub, 8))


# ------------------------------ JAX wrapper ----------------------------------

def _pick_tile(HW, N, c_io, tile_hw):
    """Lane-tile size: big (amortize ~0.35us/step), VMEM-budgeted, >=2 steps."""
    # keep the double-buffered f32 I/O DMA buffers within ~12 MiB of VMEM
    budget = 12 * 1024 * 1024
    t_budget = max(128, budget // (8 * c_io))       # 2 buffers * 4 bytes/elem
    t = min(tile_hw, HW, t_budget)
    # v7x has 2 TensorCores: make sure the parallel grid has >= 2 steps
    if N == 1 and t >= HW and HW >= 256:
        t = HW // 2
    if t < HW:
        t = max(128, (t // 128) * 128)              # keep lane dim 128-aligned
    return t


@functools.partial(jax.jit, static_argnames=("tile_hw",))
def attention_gate_pallas(p, m, v, fused, tile_hw=16384):
    N, F_p, H, W = p.shape
    F_m = m.shape[1]
    F_v = v.shape[1]
    HW = H * W
    F_int = fused[0].shape[0]

    # free reshapes (no copies): NCHW -> (N, C, H*W)
    pf = p.reshape(N, F_p, HW)
    mf = m.reshape(N, F_m, HW)
    vf = v.reshape(N, F_v, HW)

    t = _pick_tile(HW, N, F_p + F_m + 2 * F_v, tile_hw)
    grid = (N, pl.cdiv(HW, t))

    # in-kernel sub-tile: keep intermediates near vreg scale
    sub = t
    for cand in (512, 256, 128):
        if t % cand == 0:
            sub = cand
            break

    def row_spec(c):
        return pl.BlockSpec((None, c, t), lambda n, j: (n, 0, j))

    def full_spec(shape):
        return pl.BlockSpec(shape, lambda n, j: (0,) * len(shape))

    in_specs = ([row_spec(F_p), row_spec(F_m), row_spec(F_v)]
                + [full_spec(w.shape) for w in fused])

    kernel = functools.partial(_attention_gate_kernel, F_int=F_int, sub=sub)

    out = pl.pallas_call(
        kernel,
        out_shape=jax.ShapeDtypeStruct((N, F_v, HW), jnp.float32),
        grid=grid,
        in_specs=in_specs,
        out_specs=row_spec(F_v),
        compiler_params=pltpu.CompilerParams(
            dimension_semantics=("parallel", "parallel"),
            vmem_limit_bytes=32 * 1024 * 1024),
    )(pf, mf, vf, *fused)

    return out.reshape(N, F_v, H, W)


# ----------------------- deterministic parameter setup -----------------------

def _fold_bn(w, b, gamma, beta, mean, var, eps=1e-5):
    """Fold BatchNorm (eval mode) into a (Cin, Cout) weight and (Cout,) bias."""
    scale = gamma / jnp.sqrt(var + eps)
    return w * scale[None, :], (b - mean) * scale + beta


def make_params(F_p, F_m, F_v, F_int, key):
    """Natural per-branch parameters (Cin, Cout layout), BN folded."""
    ks = iter(jax.random.split(key, 40))

    def w(shape, s=0.1):
        return jax.random.normal(next(ks), shape, jnp.float32) * s

    def bn(c):
        gamma = 1.0 + 0.1 * jax.random.normal(next(ks), (c,), jnp.float32)
        beta = 0.05 * jax.random.normal(next(ks), (c,), jnp.float32)
        mean = 0.1 * jax.random.normal(next(ks), (c,), jnp.float32)
        var = 0.5 + 0.2 * jnp.abs(jax.random.normal(next(ks), (c,), jnp.float32))
        return gamma, beta, mean, var

    # W_g1: depthwise 1x1 (per-channel scale/shift) + pointwise 1x1 + BN
    dw_w = w((F_p,))
    dw_b = w((F_p,), 0.05)
    pw_w = w((F_p, F_int))
    pw_b = w((F_int,), 0.05)
    wg1 = dw_w[:, None] * pw_w
    bg1 = dw_b @ pw_w + pw_b
    wg1, bg1 = _fold_bn(wg1, bg1, *bn(F_int))

    def conv_bn(cin, cout):
        cw = w((cin, cout))
        cb = w((cout,), 0.05)
        return _fold_bn(cw, cb, *bn(cout))

    wx1, bx1 = conv_bn(F_m, F_int)
    wg2, bg2 = conv_bn(F_m, F_int)
    wx2, bx2 = conv_bn(F_v, F_int)
    wpsi1, bpsi1 = conv_bn(F_int, 1)
    wpsi2, bpsi2 = conv_bn(F_int, 1)
    wpo = w((F_m + F_v, F_v))
    bpo = w((F_v,), 0.05)

    return dict(wg1=wg1, bg1=bg1, wx1=wx1, bx1=bx1, wg2=wg2, bg2=bg2,
                wx2=wx2, bx2=bx2, wpsi1=wpsi1, bpsi1=bpsi1,
                wpsi2=wpsi2, bpsi2=bpsi2, wpo=wpo, bpo=bpo)


def fuse_params(P):
    """Transpose/stack to the channel-major fused layout the kernel consumes."""
    F_m = P["wx1"].shape[0]
    wp = P["wg1"].T                                               # (F_int, F_p)
    wm = jnp.concatenate([P["wx1"].T, P["wg2"].T,
                          P["wpo"][:F_m].T], axis=0)              # (2F_int+F_v, F_m)
    wv = jnp.concatenate([P["wx2"].T, P["wpo"][F_m:].T], axis=0)  # (F_int+F_v, F_v)
    b12 = jnp.concatenate([P["bg1"] + P["bx1"],
                           P["bg2"] + P["bx2"]])[:, None]         # (2F_int, 1)
    wpsi = jnp.concatenate([P["wpsi1"], P["wpsi2"]], axis=1)      # (F_int, 2)
    bpsi = jnp.concatenate([P["bpsi1"], P["bpsi2"]])[:, None]     # (2, 1)
    bpo = P["bpo"][:, None]                                       # (F_v, 1)
    return (wp, wm, wv, b12, wpsi, bpsi, bpo)


# ------------------------------ pure-JAX reference ---------------------------

def reference(p, m, v, P):
    N, F_p, H, W = p.shape
    F_m = m.shape[1]
    M = N * H * W
    flat = lambda x: jnp.transpose(x, (0, 2, 3, 1)).reshape(M, x.shape[1])
    pf, mf, vf = flat(p), flat(m), flat(v)
    g1 = pf @ P["wg1"] + P["bg1"]
    x1 = mf @ P["wx1"] + P["bx1"]
    psi1 = jax.nn.sigmoid(jnp.maximum(g1 + x1, 0.0) @ P["wpsi1"] + P["bpsi1"])
    g2 = mf @ P["wg2"] + P["bg2"]
    x2 = vf @ P["wx2"] + P["bx2"]
    psi2 = jax.nn.sigmoid(jnp.maximum(g2 + x2, 0.0) @ P["wpsi2"] + P["bpsi2"])
    out = (mf * psi1) @ P["wpo"][:F_m] + (vf * psi2) @ P["wpo"][F_m:] + P["bpo"]
    out = out.reshape(N, H, W, -1)
    return jnp.transpose(out, (0, 3, 1, 2))


# ---------------------------------- main --------------------------------------

if __name__ == "__main__":
    F_p, F_m, F_v, F_int = 6, 8, 4, 16

    key = jax.random.PRNGKey(0)
    kp, km, kv, kw, kp2, km2, kv2 = jax.random.split(key, 7)

    params = make_params(F_p, F_m, F_v, F_int, kw)
    fused = fuse_params(params)

    # Case 1: batch of 2, 16x16 -> full-row tile per image, grid (2, 1).
    N, H, W = 2, 16, 16
    p = jax.random.normal(kp, (N, F_p, H, W), jnp.float32)
    m = jax.random.normal(km, (N, F_m, H, W), jnp.float32)
    v = jax.random.normal(kv, (N, F_v, H, W), jnp.float32)
    out = jax.block_until_ready(attention_gate_pallas(p, m, v, fused))
    ref = jax.block_until_ready(reference(p, m, v, params))
    np.testing.assert_allclose(np.asarray(out), np.asarray(ref),
                               rtol=1e-5, atol=1e-5)
    assert out.shape == (N, F_v, H, W)

    # Case 2: single image, 48x48 with a small tile -> exercises the multi-tile
    # grid, the partial (masked) tail tile and the in-kernel sub-tile loop.
    N2, H2, W2 = 1, 48, 48
    p2 = jax.random.normal(kp2, (N2, F_p, H2, W2), jnp.float32)
    m2 = jax.random.normal(km2, (N2, F_m, H2, W2), jnp.float32)
    v2 = jax.random.normal(kv2, (N2, F_v, H2, W2), jnp.float32)
    out2 = jax.block_until_ready(
        attention_gate_pallas(p2, m2, v2, fused, tile_hw=1024))
    ref2 = jax.block_until_ready(reference(p2, m2, v2, params))
    np.testing.assert_allclose(np.asarray(out2), np.asarray(ref2),
                               rtol=1e-5, atol=1e-5)

    print("KERNEL_OK")
</pallas_src>

<mosaic_0001>
module attributes {stable_mosaic.version = 11 : i64} {
  func.func @_attention_gate_kernel(%arg0: i32, %arg1: i32, %arg2: memref<1x6x256xf32, #tpu.memory_space<vmem>>, %arg3: memref<1x8x256xf32, #tpu.memory_space<vmem>>, %arg4: memref<1x4x256xf32, #tpu.memory_space<vmem>>, %arg5: memref<16x6xf32, #tpu.memory_space<vmem>>, %arg6: memref<36x8xf32, #tpu.memory_space<vmem>>, %arg7: memref<20x4xf32, #tpu.memory_space<vmem>>, %arg8: memref<32x1xf32, #tpu.memory_space<vmem>>, %arg9: memref<16x2xf32, #tpu.memory_space<vmem>>, %arg10: memref<2x1xf32, #tpu.memory_space<vmem>>, %arg11: memref<4x1xf32, #tpu.memory_space<vmem>>, %arg12: memref<1x4x256xf32, #tpu.memory_space<vmem>>) attributes {dimension_semantics = [#tpu.dimension_semantics<parallel>, #tpu.dimension_semantics<parallel>], iteration_bounds = array<i64: 2, 1>, scalar_prefetch = 0 : i64, scratch_operands = 0 : i64, tpu.core_type = #tpu.core_type<tc>, window_params = [{transform_indices = @transform_0, window_bounds = array<i64: 1, 6, 256>}, {transform_indices = @transform_1, window_bounds = array<i64: 1, 8, 256>}, {transform_indices = @transform_2, window_bounds = array<i64: 1, 4, 256>}, {pipeline_mode = #tpu.pipeline_mode<synchronous>, transform_indices = @transform_3, window_bounds = array<i64: 16, 6>}, {pipeline_mode = #tpu.pipeline_mode<synchronous>, transform_indices = @transform_4, window_bounds = array<i64: 36, 8>}, {pipeline_mode = #tpu.pipeline_mode<synchronous>, transform_indices = @transform_5, window_bounds = array<i64: 20, 4>}, {pipeline_mode = #tpu.pipeline_mode<synchronous>, transform_indices = @transform_6, window_bounds = array<i64: 32, 1>}, {pipeline_mode = #tpu.pipeline_mode<synchronous>, transform_indices = @transform_7, window_bounds = array<i64: 16, 2>}, {pipeline_mode = #tpu.pipeline_mode<synchronous>, transform_indices = @transform_8, window_bounds = array<i64: 2, 1>}, {pipeline_mode = #tpu.pipeline_mode<synchronous>, transform_indices = @transform_9, window_bounds = array<i64: 4, 1>}, {transform_indices = @transform_10, window_bounds = array<i64: 1, 4, 256>}]} {
    %c0 = arith.constant 0 : index
    %c0_0 = arith.constant 0 : index
    %0 = vector.load %arg5[%c0, %c0_0] : memref<16x6xf32, #tpu.memory_space<vmem>>, vector<16x6xf32>
    %c0_1 = arith.constant 0 : index
    %c0_2 = arith.constant 0 : index
    %1 = vector.load %arg6[%c0_1, %c0_2] : memref<36x8xf32, #tpu.memory_space<vmem>>, vector<36x8xf32>
    %c0_3 = arith.constant 0 : index
    %c0_4 = arith.constant 0 : index
    %2 = vector.load %arg7[%c0_3, %c0_4] : memref<20x4xf32, #tpu.memory_space<vmem>>, vector<20x4xf32>
    %c0_5 = arith.constant 0 : index
    %c0_6 = arith.constant 0 : index
    %3 = vector.load %arg8[%c0_5, %c0_6] : memref<32x1xf32, #tpu.memory_space<vmem>>, vector<16x1xf32>
    %c16 = arith.constant 16 : index
    %c0_7 = arith.constant 0 : index
    %4 = vector.load %arg8[%c16, %c0_7] : memref<32x1xf32, #tpu.memory_space<vmem>>, vector<16x1xf32>
    %c0_8 = arith.constant 0 : index
    %c0_9 = arith.constant 0 : index
    %5 = vector.load %arg9[%c0_8, %c0_9] : memref<16x2xf32, #tpu.memory_space<vmem>>, vector<16x2xf32>
    %c0_10 = arith.constant 0 : index
    %c0_11 = arith.constant 0 : index
    %6 = vector.load %arg10[%c0_10, %c0_11] : memref<2x1xf32, #tpu.memory_space<vmem>>, vector<2x1xf32>
    %c0_12 = arith.constant 0 : index
    %c0_13 = arith.constant 0 : index
    %7 = vector.load %arg11[%c0_12, %c0_13] : memref<4x1xf32, #tpu.memory_space<vmem>>, vector<4x1xf32>
    %c0_14 = arith.constant 0 : index
    %c0_15 = arith.constant 0 : index
    %c0_16 = arith.constant 0 : index
    %8 = vector.load %arg2[%c0_14, %c0_15, %c0_16] : memref<1x6x256xf32, #tpu.memory_space<vmem>>, vector<1x6x256xf32>
    %9 = vector.shape_cast %8 : vector<1x6x256xf32> to vector<6x256xf32>
    %c0_17 = arith.constant 0 : index
    %c0_18 = arith.constant 0 : index
    %c0_19 = arith.constant 0 : index
    %10 = vector.load %arg3[%c0_17, %c0_18, %c0_19] : memref<1x8x256xf32, #tpu.memory_space<vmem>>, vector<1x8x256xf32>
    %11 = vector.shape_cast %10 : vector<1x8x256xf32> to vector<8x256xf32>
    %c0_20 = arith.constant 0 : index
    %c0_21 = arith.constant 0 : index
    %c0_22 = arith.constant 0 : index
    %12 = vector.load %arg4[%c0_20, %c0_21, %c0_22] : memref<1x4x256xf32, #tpu.memory_space<vmem>>, vector<1x4x256xf32>
    %13 = vector.shape_cast %12 : vector<1x4x256xf32> to vector<4x256xf32>
    %cst = arith.constant dense<0.000000e+00> : vector<16x256xf32>
    %14 = tpu.matmul %0, %9, %cst {dimension_numbers = #tpu.dot_dimension_numbers<[1], [0], [0], [1], [0, 0, 1, 1], [], []>} : vector<16x6xf32>, vector<6x256xf32>, vector<16x256xf32> -> vector<16x256xf32>
    %cst_23 = arith.constant dense<0.000000e+00> : vector<36x256xf32>
    %15 = tpu.matmul %1, %11, %cst_23 {dimension_numbers = #tpu.dot_dimension_numbers<[1], [0], [0], [1], [0, 0, 1, 1], [], []>} : vector<36x8xf32>, vector<8x256xf32>, vector<36x256xf32> -> vector<36x256xf32>
    %cst_24 = arith.constant dense<0.000000e+00> : vector<20x256xf32>
    %16 = tpu.matmul %2, %13, %cst_24 {dimension_numbers = #tpu.dot_dimension_numbers<[1], [0], [0], [1], [0, 0, 1, 1], [], []>} : vector<20x4xf32>, vector<4x256xf32>, vector<20x256xf32> -> vector<20x256xf32>
    %17 = vector.extract_strided_slice %15 {offsets = [0, 0], sizes = [16, 256], strides = [1, 1]} : vector<36x256xf32> to vector<16x256xf32>
    %18 = arith.addf %14, %17 : vector<16x256xf32>
    %19 = vector.broadcast %3 : vector<16x1xf32> to vector<16x256xf32>
    %20 = arith.addf %18, %19 : vector<16x256xf32>
    %cst_25 = arith.constant 0.000000e+00 : f32
    %21 = vector.broadcast %cst_25 : f32 to vector<16x256xf32>
    %22 = arith.maximumf %20, %21 : vector<16x256xf32>
    %23 = vector.extract_strided_slice %15 {offsets = [16, 0], sizes = [16, 256], strides = [1, 1]} : vector<36x256xf32> to vector<16x256xf32>
    %24 = vector.extract_strided_slice %16 {offsets = [0, 0], sizes = [16, 256], strides = [1, 1]} : vector<20x256xf32> to vector<16x256xf32>
    %25 = arith.addf %23, %24 : vector<16x256xf32>
    %26 = vector.broadcast %4 : vector<16x1xf32> to vector<16x256xf32>
    %27 = arith.addf %25, %26 : vector<16x256xf32>
    %cst_26 = arith.constant 0.000000e+00 : f32
    %28 = vector.broadcast %cst_26 : f32 to vector<16x256xf32>
    %29 = arith.maximumf %27, %28 : vector<16x256xf32>
    %30 = vector.extract_strided_slice %5 {offsets = [0, 0], sizes = [16, 1], strides = [1, 1]} : vector<16x2xf32> to vector<16x1xf32>
    %31 = vector.broadcast %30 : vector<16x1xf32> to vector<16x256xf32>
    %32 = arith.mulf %22, %31 : vector<16x256xf32>
    %cst_27 = arith.constant dense<0.000000e+00> : vector<256xf32>
    %33 = vector.multi_reduction <add>, %32, %cst_27 [0] : vector<16x256xf32> to vector<256xf32>
    %34 = vector.shape_cast %33 : vector<256xf32> to vector<1x256xf32>
    %35 = vector.extract_strided_slice %6 {offsets = [0, 0], sizes = [1, 1], strides = [1, 1]} : vector<2x1xf32> to vector<1x1xf32>
    %36 = vector.broadcast %35 : vector<1x1xf32> to vector<1x256xf32>
    %37 = arith.addf %34, %36 : vector<1x256xf32>
    %38 = vector.extract_strided_slice %5 {offsets = [0, 1], sizes = [16, 1], strides = [1, 1]} : vector<16x2xf32> to vector<16x1xf32>
    %39 = vector.broadcast %38 : vector<16x1xf32> to vector<16x256xf32>
    %40 = arith.mulf %29, %39 : vector<16x256xf32>
    %cst_28 = arith.constant dense<0.000000e+00> : vector<256xf32>
    %41 = vector.multi_reduction <add>, %40, %cst_28 [0] : vector<16x256xf32> to vector<256xf32>
    %42 = vector.shape_cast %41 : vector<256xf32> to vector<1x256xf32>
    %43 = vector.extract_strided_slice %6 {offsets = [1, 0], sizes = [1, 1], strides = [1, 1]} : vector<2x1xf32> to vector<1x1xf32>
    %44 = vector.broadcast %43 : vector<1x1xf32> to vector<1x256xf32>
    %45 = arith.addf %42, %44 : vector<1x256xf32>
    %cst_29 = arith.constant 0.000000e+00 : f32
    %46 = vector.broadcast %cst_29 : f32 to vector<1x256xf32>
    %47 = arith.subf %46, %37 : vector<1x256xf32>
    %48 = math.exp %47 : vector<1x256xf32>
    %cst_30 = arith.constant 1.000000e+00 : f32
    %49 = vector.broadcast %cst_30 : f32 to vector<1x256xf32>
    %50 = arith.addf %49, %48 : vector<1x256xf32>
    %cst_31 = arith.constant 1.000000e+00 : f32
    %51 = vector.broadcast %cst_31 : f32 to vector<1x256xf32>
    %52 = arith.divf %51, %50 : vector<1x256xf32>
    %cst_32 = arith.constant 0.000000e+00 : f32
    %53 = vector.broadcast %cst_32 : f32 to vector<1x256xf32>
    %54 = arith.subf %53, %45 : vector<1x256xf32>
    %55 = math.exp %54 : vector<1x256xf32>
    %cst_33 = arith.constant 1.000000e+00 : f32
    %56 = vector.broadcast %cst_33 : f32 to vector<1x256xf32>
    %57 = arith.addf %56, %55 : vector<1x256xf32>
    %cst_34 = arith.constant 1.000000e+00 : f32
    %58 = vector.broadcast %cst_34 : f32 to vector<1x256xf32>
    %59 = arith.divf %58, %57 : vector<1x256xf32>
    %60 = vector.extract_strided_slice %15 {offsets = [32, 0], sizes = [4, 256], strides = [1, 1]} : vector<36x256xf32> to vector<4x256xf32>
    %61 = vector.broadcast %52 : vector<1x256xf32> to vector<4x256xf32>
    %62 = arith.mulf %60, %61 : vector<4x256xf32>
    %63 = vector.extract_strided_slice %16 {offsets = [16, 0], sizes = [4, 256], strides = [1, 1]} : vector<20x256xf32> to vector<4x256xf32>
    %64 = vector.broadcast %59 : vector<1x256xf32> to vector<4x256xf32>
    %65 = arith.mulf %63, %64 : vector<4x256xf32>
    %66 = arith.addf %62, %65 : vector<4x256xf32>
    %67 = vector.broadcast %7 : vector<4x1xf32> to vector<4x256xf32>
    %68 = arith.addf %66, %67 : vector<4x256xf32>
    %c0_35 = arith.constant 0 : index
    %c0_36 = arith.constant 0 : index
    %c0_37 = arith.constant 0 : index
    %69 = vector.load %arg12[%c0_35, %c0_36, %c0_37] : memref<1x4x256xf32, #tpu.memory_space<vmem>>, vector<1x4x256xf32>
    %70 = vector.shape_cast %69 : vector<1x4x256xf32> to vector<4x256xf32>
    %71 = vector.shape_cast %68 : vector<4x256xf32> to vector<1x4x256xf32>
    tpu.vector_store %arg12[%c0_35, %c0_36, %c0_37], %71 {strides = array<i32>} : memref<1x4x256xf32, #tpu.memory_space<vmem>>, vector<1x4x256xf32>,
    return
  }
  func.func @transform_0(%arg0: i32, %arg1: i32) -> (i32, i32, i32) {
    %c0_i32 = arith.constant 0 : i32
    %c0_i32_0 = arith.constant 0 : i32
    return %arg0, %c0_i32, %arg1 : i32, i32, i32
  }
  func.func @transform_1(%arg0: i32, %arg1: i32) -> (i32, i32, i32) {
    %c0_i32 = arith.constant 0 : i32
    %c0_i32_0 = arith.constant 0 : i32
    return %arg0, %c0_i32, %arg1 : i32, i32, i32
  }
  func.func @transform_2(%arg0: i32, %arg1: i32) -> (i32, i32, i32) {
    %c0_i32 = arith.constant 0 : i32
    %c0_i32_0 = arith.constant 0 : i32
    return %arg0, %c0_i32, %arg1 : i32, i32, i32
  }
  func.func @transform_3(%arg0: i32, %arg1: i32) -> (i32, i32) {
    %c0_i32 = arith.constant 0 : i32
    %c0_i32_0 = arith.constant 0 : i32
    %c0_i32_1 = arith.constant 0 : i32
    return %c0_i32, %c0_i32_0 : i32, i32
  }
  func.func @transform_4(%arg0: i32, %arg1: i32) -> (i32, i32) {
    %c0_i32 = arith.constant 0 : i32
    %c0_i32_0 = arith.constant 0 : i32
    %c0_i32_1 = arith.constant 0 : i32
    return %c0_i32, %c0_i32_0 : i32, i32
  }
  func.func @transform_5(%arg0: i32, %arg1: i32) -> (i32, i32) {
    %c0_i32 = arith.constant 0 : i32
    %c0_i32_0 = arith.constant 0 : i32
    %c0_i32_1 = arith.constant 0 : i32
    return %c0_i32, %c0_i32_0 : i32, i32
  }
  func.func @transform_6(%arg0: i32, %arg1: i32) -> (i32, i32) {
    %c0_i32 = arith.constant 0 : i32
    %c0_i32_0 = arith.constant 0 : i32
    %c0_i32_1 = arith.constant 0 : i32
    return %c0_i32, %c0_i32_0 : i32, i32
  }
  func.func @transform_7(%arg0: i32, %arg1: i32) -> (i32, i32) {
    %c0_i32 = arith.constant 0 : i32
    %c0_i32_0 = arith.constant 0 : i32
    %c0_i32_1 = arith.constant 0 : i32
    return %c0_i32, %c0_i32_0 : i32, i32
  }
  func.func @transform_8(%arg0: i32, %arg1: i32) -> (i32, i32) {
    %c0_i32 = arith.constant 0 : i32
    %c0_i32_0 = arith.constant 0 : i32
    %c0_i32_1 = arith.constant 0 : i32
    return %c0_i32, %c0_i32_0 : i32, i32
  }
  func.func @transform_9(%arg0: i32, %arg1: i32) -> (i32, i32) {
    %c0_i32 = arith.constant 0 : i32
    %c0_i32_0 = arith.constant 0 : i32
    %c0_i32_1 = arith.constant 0 : i32
    return %c0_i32, %c0_i32_0 : i32, i32
  }
  func.func @transform_10(%arg0: i32, %arg1: i32) -> (i32, i32, i32) {
    %c0_i32 = arith.constant 0 : i32
    %c0_i32_0 = arith.constant 0 : i32
    return %arg0, %c0_i32, %arg1 : i32, i32, i32
  }
}

</mosaic_0001>

<llo_original>
// kernel: attention_gate_pallas.1
$region0: #{attention_gate_pallas.1}
  #allocation0 [shape = 'u32[]', space=smem, size = 0x4, offset = 0x4, fixed_abs, tag = 'smem constant byte address 0x4 - core index']
  #allocation1 [shape = 'u32[72,128]{1,0:T(1,128)}', space=vmem, size = 0x9000, scoped, tag = 'internal scratch']
  %s0 = inlined_call_operand.vmem [shape: f32[2,6,256], index: 0, kind: input, shape index: {}]
  %s1 = inlined_call_operand.vmem [shape: f32[2,8,256], index: 1, kind: input, shape index: {}]
  %s2 = inlined_call_operand.vmem [shape: f32[2,4,256], index: 2, kind: input, shape index: {}]
  %s3 = inlined_call_operand.vmem [shape: f32[16,6], index: 3, kind: input, shape index: {}]
  %s4 = inlined_call_operand.vmem [shape: f32[36,8], index: 4, kind: input, shape index: {}]
  %s5 = inlined_call_operand.vmem [shape: f32[20,4], index: 5, kind: input, shape index: {}]
  %s6 = inlined_call_operand.vmem [shape: f32[32,1], index: 6, kind: input, shape index: {}]
  %s7 = inlined_call_operand.vmem [shape: f32[16,2], index: 7, kind: input, shape index: {}]
  %s8 = inlined_call_operand.vmem [shape: f32[2,1], index: 8, kind: input, shape index: {}]
  %s9 = inlined_call_operand.vmem [shape: f32[4,1], index: 9, kind: input, shape index: {}]
  %s10 = inlined_call_operand.vmem [shape: f32[2,4,256], index: 10, kind: output, shape index: {}]
  %s11 = sld [smem:[#allocation0]]
  $region73: #{attention_gate_pallas.1} parent=0
    _
  %s13 = ssub.s32 1, %s11
  %s14 = scalar_select 0, %s13, %s11
  loop: start=0, step=1, limit=4
  $region2: #{attention_gate_pallas.1} parent=0 // loop_pre_header
    _
  $region3: #{attention_gate_pallas.1} parent=0 // loop_header
    %s16 = sphi 0, %s20
    %p17 = scmp.ge.s32.totalorder %s16, 4
    %s23 = sphi 0, %s35
    %s24 = sphi 0, %s31
    %s25 = sphi 0, %s23
    %s26 = sphi 0, %s24
    %s27 = sphi 0, %s25
    %s28 = sphi 0, %s26
    %s40 = sphi 0, %s42
    %s43 = sphi 0, %s40
    %s44 = sphi 0, %s43
    %s60 = sphi 0, %s44
    %s68 = sphi 0, %s70
    %s71 = sphi 0, %s68
    %s72 = sphi 0, %s71
    %s88 = sphi 0, %s72
    %s96 = sphi 0, %s98
    %s99 = sphi 0, %s96
    %s100 = sphi 0, %s99
    %s116 = sphi 0, %s100
    %s120 = sphi 0, %s120
    %s122 = sphi 0, %s120
    %s123 = sphi 0, %s122
    %s137 = sphi 0, %s123
    %s141 = sphi 0, %s141
    %s143 = sphi 0, %s141
    %s144 = sphi 0, %s143
    %s158 = sphi 0, %s144
    %s162 = sphi 0, %s162
    %s164 = sphi 0, %s162
    %s165 = sphi 0, %s164
    %s179 = sphi 0, %s165
    %s183 = sphi 0, %s183
    %s185 = sphi 0, %s183
    %s186 = sphi 0, %s185
    %s200 = sphi 0, %s186
    %s204 = sphi 0, %s204
    %s206 = sphi 0, %s204
    %s207 = sphi 0, %s206
    %s221 = sphi 0, %s207
    %s225 = sphi 0, %s225
    %s227 = sphi 0, %s225
    %s228 = sphi 0, %s227
    %s242 = sphi 0, %s228
    %s246 = sphi 0, %s246
    %s248 = sphi 0, %s246
    %s249 = sphi 0, %s248
    %s263 = sphi 0, %s249
    %s271 = sphi 0, %s273
    %s274 = sphi 0, %s271
    %s275 = sphi 0, %s274
    %s291 = sphi 0, %s275
  $region4: #{attention_gate_pallas.1} parent=0 // loop_header_branch
    %19 = sbr.rel (%p17) target = $region8
  $region5: #{attention_gate_pallas.1} parent=0 // loop_body
    %s21 = ssub.s32 %s16, 1
    %s22 = ssub.s32 %s16, 2
    %s29 = sadd.s32 1, %s24
    %p30 = scmp.ge.s32.totalorder %s29, 1
    %s31 = scalar_select %p30, 0, %s29
    %s32 = sadd.s32 1, %s23
    %s33 = scalar_select %p30, %s32, %s23
    %p34 = scmp.ge.s32.totalorder %s33, 2
    %s35 = scalar_select %p34, 0, %s33
    %s36 = ssub.s32 %s23, %s35
    %s37 = ssub.s32 %s24, %s31
    %s38 = sor.u32 %s36, %s37
    %p39 = scmp.eq.s32.totalorder %s38, 0
    %s41 = sadd.s32 %s40, 1
    %s42 = scalar_select %p39, %s40, %s41
    %p45 = pneg %p39
    %p46 = scmp.eq.s32.totalorder %s16, 1
    %p47 = por %p45, %p46
    %p48 = scmp.ne.s32.totalorder %s40, %s43
    %p49 = scmp.eq.s32.totalorder %s16, 0
    %p50 = por %p48, %p49
    %p51 = scmp.ne.s32.totalorder %s40, %s43
    %p52 = scmp.eq.s32.totalorder %s21, 1
    %p53 = por %p51, %p52
    %p54 = scmp.ne.s32.totalorder %s43, %s44
    %p55 = scmp.eq.s32.totalorder %s21, 0
    %p56 = por %p54, %p55
    %p57 = scmp.ne.s32.totalorder %s43, %s44
    %p58 = scmp.eq.s32.totalorder %s22, 1
    %p59 = por %p57, %p58
    %p61 = scmp.ne.s32.totalorder %s44, %s60
    %p62 = scmp.eq.s32.totalorder %s22, 0
    %p63 = por %p61, %p62
    %s64 = ssub.s32 %s23, %s35
    %s65 = ssub.s32 %s24, %s31
    %s66 = sor.u32 %s64, %s65
    %p67 = scmp.eq.s32.totalorder %s66, 0
    %s69 = sadd.s32 %s68, 1
    %s70 = scalar_select %p67, %s68, %s69
    %p73 = pneg %p67
    %p74 = scmp.eq.s32.totalorder %s16, 1
    %p75 = por %p73, %p74
    %p76 = scmp.ne.s32.totalorder %s68, %s71
    %p77 = scmp.eq.s32.totalorder %s16, 0
    %p78 = por %p76, %p77
    %p79 = scmp.ne.s32.totalorder %s68, %s71
    %p80 = scmp.eq.s32.totalorder %s21, 1
    %p81 = por %p79, %p80
    %p82 = scmp.ne.s32.totalorder %s71, %s72
    %p83 = scmp.eq.s32.totalorder %s21, 0
    %p84 = por %p82, %p83
    %p85 = scmp.ne.s32.totalorder %s71, %s72
    %p86 = scmp.eq.s32.totalorder %s22, 1
    %p87 = por %p85, %p86
    %p89 = scmp.ne.s32.totalorder %s72, %s88
    %p90 = scmp.eq.s32.totalorder %s22, 0
    %p91 = por %p89, %p90
    %s92 = ssub.s32 %s23, %s35
    %s93 = ssub.s32 %s24, %s31
    %s94 = sor.u32 %s92, %s93
    %p95 = scmp.eq.s32.totalorder %s94, 0
    %s97 = sadd.s32 %s96, 1
    %s98 = scalar_select %p95, %s96, %s97
    %p101 = pneg %p95
    %p102 = scmp.eq.s32.totalorder %s16, 1
    %p103 = por %p101, %p102
    %p104 = scmp.ne.s32.totalorder %s96, %s99
    %p105 = scmp.eq.s32.totalorder %s16, 0
    %p106 = por %p104, %p105
    %p107 = scmp.ne.s32.totalorder %s96, %s99
    %p108 = scmp.eq.s32.totalorder %s21, 1
    %p109 = por %p107, %p108
    %p110 = scmp.ne.s32.totalorder %s99, %s100
    %p111 = scmp.eq.s32.totalorder %s21, 0
    %p112 = por %p110, %p111
    %p113 = scmp.ne.s32.totalorder %s99, %s100
    %p114 = scmp.eq.s32.totalorder %s22, 1
    %p115 = por %p113, %p114
    %p117 = scmp.ne.s32.totalorder %s100, %s116
    %p118 = scmp.eq.s32.totalorder %s22, 0
    %p119 = por %p117, %p118
    %s121 = sadd.s32 %s120, 1
    %p124 = scmp.eq.s32.totalorder %s16, 1
    %p125 = scmp.ne.s32.totalorder %s120, %s122
    %p126 = scmp.eq.s32.totalorder %s16, 0
    %p127 = por %p125, %p126
    %p128 = scmp.ne.s32.totalorder %s120, %s122
    %p129 = scmp.eq.s32.totalorder %s21, 1
    %p130 = por %p128, %p129
    %p131 = scmp.ne.s32.totalorder %s122, %s123
    %p132 = scmp.eq.s32.totalorder %s21, 0
    %p133 = por %p131, %p132
    %p134 = scmp.ne.s32.totalorder %s122, %s123
    %p135 = scmp.eq.s32.totalorder %s22, 1
    %p136 = por %p134, %p135
    %p138 = scmp.ne.s32.totalorder %s123, %s137
    %p139 = scmp.eq.s32.totalorder %s22, 0
    %p140 = por %p138, %p139
    %s142 = sadd.s32 %s141, 1
    %p145 = scmp.eq.s32.totalorder %s16, 1
    %p146 = scmp.ne.s32.totalorder %s141, %s143
    %p147 = scmp.eq.s32.totalorder %s16, 0
    %p148 = por %p146, %p147
    %p149 = scmp.ne.s32.totalorder %s141, %s143
    %p150 = scmp.eq.s32.totalorder %s21, 1
    %p151 = por %p149, %p150
    %p152 = scmp.ne.s32.totalorder %s143, %s144
    %p153 = scmp.eq.s32.totalorder %s21, 0
    %p154 = por %p152, %p153
    %p155 = scmp.ne.s32.totalorder %s143, %s144
    %p156 = scmp.eq.s32.totalorder %s22, 1
    %p157 = por %p155, %p156
    %p159 = scmp.ne.s32.totalorder %s144, %s158
    %p160 = scmp.eq.s32.totalorder %s22, 0
    %p161 = por %p159, %p160
    %s163 = sadd.s32 %s162, 1
    %p166 = scmp.eq.s32.totalorder %s16, 1
    %p167 = scmp.ne.s32.totalorder %s162, %s164
    %p168 = scmp.eq.s32.totalorder %s16, 0
    %p169 = por %p167, %p168
    %p170 = scmp.ne.s32.totalorder %s162, %s164
    %p171 = scmp.eq.s32.totalorder %s21, 1
    %p172 = por %p170, %p171
    %p173 = scmp.ne.s32.totalorder %s164, %s165
    %p174 = scmp.eq.s32.totalorder %s21, 0
    %p175 = por %p173, %p174
    %p176 = scmp.ne.s32.totalorder %s164, %s165
    %p177 = scmp.eq.s32.totalorder %s22, 1
    %p178 = por %p176, %p177
    %p180 = scmp.ne.s32.totalorder %s165, %s179
    %p181 = scmp.eq.s32.totalorder %s22, 0
    %p182 = por %p180, %p181
    %s184 = sadd.s32 %s183, 1
    %p187 = scmp.eq.s32.totalorder %s16, 1
    %p188 = scmp.ne.s32.totalorder %s183, %s185
    %p189 = scmp.eq.s32.totalorder %s16, 0
    %p190 = por %p188, %p189
    %p191 = scmp.ne.s32.totalorder %s183, %s185
    %p192 = scmp.eq.s32.totalorder %s21, 1
    %p193 = por %p191, %p192
    %p194 = scmp.ne.s32.totalorder %s185, %s186
    %p195 = scmp.eq.s32.totalorder %s21, 0
    %p196 = por %p194, %p195
    %p197 = scmp.ne.s32.totalorder %s185, %s186
    %p198 = scmp.eq.s32.totalorder %s22, 1
    %p199 = por %p197, %p198
    %p201 = scmp.ne.s32.totalorder %s186, %s200
    %p202 = scmp.eq.s32.totalorder %s22, 0
    %p203 = por %p201, %p202
    %s205 = sadd.s32 %s204, 1
    %p208 = scmp.eq.s32.totalorder %s16, 1
    %p209 = scmp.ne.s32.totalorder %s204, %s206
    %p210 = scmp.eq.s32.totalorder %s16, 0
    %p211 = por %p209, %p210
    %p212 = scmp.ne.s32.totalorder %s204, %s206
    %p213 = scmp.eq.s32.totalorder %s21, 1
    %p214 = por %p212, %p213
    %p215 = scmp.ne.s32.totalorder %s206, %s207
    %p216 = scmp.eq.s32.totalorder %s21, 0
    %p217 = por %p215, %p216
    %p218 = scmp.ne.s32.totalorder %s206, %s207
    %p219 = scmp.eq.s32.totalorder %s22, 1
    %p220 = por %p218, %p219
    %p222 = scmp.ne.s32.totalorder %s207, %s221
    %p223 = scmp.eq.s32.totalorder %s22, 0
    %p224 = por %p222, %p223
    %s226 = sadd.s32 %s225, 1
    %p229 = scmp.eq.s32.totalorder %s16, 1
    %p230 = scmp.ne.s32.totalorder %s225, %s227
    %p231 = scmp.eq.s32.totalorder %s16, 0
    %p232 = por %p230, %p231
    %p233 = scmp.ne.s32.totalorder %s225, %s227
    %p234 = scmp.eq.s32.totalorder %s21, 1
    %p235 = por %p233, %p234
    %p236 = scmp.ne.s32.totalorder %s227, %s228
    %p237 = scmp.eq.s32.totalorder %s21, 0
    %p238 = por %p236, %p237
    %p239 = scmp.ne.s32.totalorder %s227, %s228
    %p240 = scmp.eq.s32.totalorder %s22, 1
    %p241 = por %p239, %p240
    %p243 = scmp.ne.s32.totalorder %s228, %s242
    %p244 = scmp.eq.s32.totalorder %s22, 0
    %p245 = por %p243, %p244
    %s247 = sadd.s32 %s246, 1
    %p250 = scmp.eq.s32.totalorder %s16, 1
    %p251 = scmp.ne.s32.totalorder %s246, %s248
    %p252 = scmp.eq.s32.totalorder %s16, 0
    %p253 = por %p251, %p252
    %p254 = scmp.ne.s32.totalorder %s246, %s248
    %p255 = scmp.eq.s32.totalorder %s21, 1
    %p256 = por %p254, %p255
    %p257 = scmp.ne.s32.totalorder %s248, %s249
    %p258 = scmp.eq.s32.totalorder %s21, 0
    %p259 = por %p257, %p258
    %p260 = scmp.ne.s32.totalorder %s248, %s249
    %p261 = scmp.eq.s32.totalorder %s22, 1
    %p262 = por %p260, %p261
    %p264 = scmp.ne.s32.totalorder %s249, %s263
    %p265 = scmp.eq.s32.totalorder %s22, 0
    %p266 = por %p264, %p265
    %s267 = ssub.s32 %s23, %s35
    %s268 = ssub.s32 %s24, %s31
    %s269 = sor.u32 %s267, %s268
    %p270 = scmp.eq.s32.totalorder %s269, 0
    %s272 = sadd.s32 %s271, 1
    %s273 = scalar_select %p270, %s271, %s272
    %p276 = pneg %p270
    %p277 = scmp.eq.s32.totalorder %s16, 1
    %p278 = por %p276, %p277
    %p279 = scmp.ne.s32.totalorder %s271, %s274
    %p280 = scmp.eq.s32.totalorder %s16, 0
    %p281 = por %p279, %p280
    %p282 = scmp.ne.s32.totalorder %s271, %s274
    %p283 = scmp.eq.s32.totalorder %s21, 1
    %p284 = por %p282, %p283
    %p285 = scmp.ne.s32.totalorder %s274, %s275
    %p286 = scmp.eq.s32.totalorder %s21, 0
    %p287 = por %p285, %p286
    %p288 = scmp.ne.s32.totalorder %s274, %s275
    %p289 = scmp.eq.s32.totalorder %s22, 1
    %p290 = por %p288, %p289
    %p292 = scmp.ne.s32.totalorder %s275, %s291
    %p293 = scmp.eq.s32.totalorder %s22, 0
    %p294 = por %p292, %p293
    %p295 = scmp.le.s32.totalorder 1, %s16
    %p296 = scmp.lt.s32.totalorder %s16, 3
    %p297 = pnand %p295, %p296
    %p298 = pneg %p297
    // Predicated region
    $region9: #{attention_gate_pallas.1} parent=5 // pred_check
      _
    $region10: #{attention_gate_pallas.1} parent=5 // pred_check_branch
      %300 = sbr.rel (%p297) target = $region12
    $region11: #{attention_gate_pallas.1} parent=5 // pred_region
      %s301 = ssub.s32 %s16, 1
      // Predicated region
      $region13: #{attention_gate_pallas.1} parent=11 // pred_check
        %p302 = pneg %p133
      $region14: #{attention_gate_pallas.1} parent=11 // pred_check_branch
        %304 = sbr.rel (%p302) target = $region16
      $region15: #{attention_gate_pallas.1} parent=11 // pred_region
        _
      $region16: #{attention_gate_pallas.1} parent=11 // pred_fallthru
        _
      // Predicated region
      $region17: #{attention_gate_pallas.1} parent=11 // pred_check
        %p305 = pneg %p154
      $region18: #{attention_gate_pallas.1} parent=11 // pred_check_branch
        %307 = sbr.rel (%p305) target = $region20
      $region19: #{attention_gate_pallas.1} parent=11 // pred_region
        _
      $region20: #{attention_gate_pallas.1} parent=11 // pred_fallthru
        _
      // Predicated region
      $region21: #{attention_gate_pallas.1} parent=11 // pred_check
        %p308 = pneg %p175
      $region22: #{attention_gate_pallas.1} parent=11 // pred_check_branch
        %310 = sbr.rel (%p308) target = $region24
      $region23: #{attention_gate_pallas.1} parent=11 // pred_region
        _
      $region24: #{attention_gate_pallas.1} parent=11 // pred_fallthru
        _
      // Predicated region
      $region25: #{attention_gate_pallas.1} parent=11 // pred_check
        %p311 = pneg %p196
      $region26: #{attention_gate_pallas.1} parent=11 // pred_check_branch
        %313 = sbr.rel (%p311) target = $region28
      $region27: #{attention_gate_pallas.1} parent=11 // pred_region
        _
      $region28: #{attention_gate_pallas.1} parent=11 // pred_fallthru
        _
      // Predicated region
      $region29: #{attention_gate_pallas.1} parent=11 // pred_check
        %p314 = pneg %p217
      $region30: #{attention_gate_pallas.1} parent=11 // pred_check_branch
        %316 = sbr.rel (%p314) target = $region32
      $region31: #{attention_gate_pallas.1} parent=11 // pred_region
        _
      $region32: #{attention_gate_pallas.1} parent=11 // pred_fallthru
        _
      // Predicated region
      $region33: #{attention_gate_pallas.1} parent=11 // pred_check
        %p317 = pneg %p238
      $region34: #{attention_gate_pallas.1} parent=11 // pred_check_branch
        %319 = sbr.rel (%p317) target = $region36
      $region35: #{attention_gate_pallas.1} parent=11 // pred_region
        _
      $region36: #{attention_gate_pallas.1} parent=11 // pred_fallthru
        _
      // Predicated region
      $region37: #{attention_gate_pallas.1} parent=11 // pred_check
        %p320 = pneg %p259
      $region38: #{attention_gate_pallas.1} parent=11 // pred_check_branch
        %322 = sbr.rel (%p320) target = $region40
      $region39: #{attention_gate_pallas.1} parent=11 // pred_region
        _
      $region40: #{attention_gate_pallas.1} parent=11 // pred_fallthru
        _
    $region12: #{attention_gate_pallas.1} parent=5 // pred_fallthru
      _
    %p323 = scmp.lt.s32.totalorder %s16, 2
    // Predicated region
    $region41: #{attention_gate_pallas.1} parent=5 // pred_check
      %p324 = pneg %p323
    $region42: #{attention_gate_pallas.1} parent=5 // pred_check_branch
      %326 = sbr.rel (%p324) target = $region44
    $region43: #{attention_gate_pallas.1} parent=5 // pred_region
      // Predicated region
      $region45: #{attention_gate_pallas.1} parent=43 // pred_check
        %p327 = pneg %p50
      $region46: #{attention_gate_pallas.1} parent=43 // pred_check_branch
        %329 = sbr.rel (%p327) target = $region48
      $region47: #{attention_gate_pallas.1} parent=43 // pred_region
        %s330 = smul.u32 2, %s24
        %p331 = scmp.lt.s32.totalorder %s23, 1
        %s332 = scalar_select %p331, %s23, 1
        %p333 = scmp.lt.s32.totalorder %s330, 1
        %s334 = scalar_select %p333, %s330, 1
        %s335 = smul.addr %s332, 2
        %s336 = sadd.s32 %s334, %s335
        %s337 = smul.addr %s336, 8
        %s338 = scalar_lea.vmem %s0, %s337
        %s339 = smul.u32 2, %s24
      $region48: #{attention_gate_pallas.1} parent=43 // pred_fallthru
        _
      // Predicated region
      $region49: #{attention_gate_pallas.1} parent=43 // pred_check
        %p340 = pneg %p78
      $region50: #{attention_gate_pallas.1} parent=43 // pred_check_branch
        %342 = sbr.rel (%p340) target = $region52
      $region51: #{attention_gate_pallas.1} parent=43 // pred_region
        %s343 = smul.u32 2, %s24
        %p344 = scmp.lt.s32.totalorder %s23, 1
        %s345 = scalar_select %p344, %s23, 1
        %p346 = scmp.lt.s32.totalorder %s343, 1
        %s347 = scalar_select %p346, %s343, 1
        %s348 = smul.addr %s345, 2
        %s349 = sadd.s32 %s347, %s348
        %s350 = smul.addr %s349, 8
        %s351 = scalar_lea.vmem %s1, %s350
        %s352 = smul.u32 2, %s24
      $region52: #{attention_gate_pallas.1} parent=43 // pred_fallthru
        _
      // Predicated region
      $region53: #{attention_gate_pallas.1} parent=43 // pred_check
        %p353 = pneg %p106
      $region54: #{attention_gate_pallas.1} parent=43 // pred_check_branch
        %355 = sbr.rel (%p353) target = $region56
      $region55: #{attention_gate_pallas.1} parent=43 // pred_region
        %s356 = smul.u32 2, %s24
        %p357 = scmp.lt.s32.totalorder %s23, 1
        %s358 = scalar_select %p357, %s23, 1
        %p359 = scmp.lt.s32.totalorder %s356, 1
        %s360 = scalar_select %p359, %s356, 1
        %s361 = smul.addr %s358, 2
        %s362 = sadd.s32 %s360, %s361
        %s363 = smul.addr %s362, 4
        %s364 = scalar_lea.vmem %s2, %s363
        %s365 = smul.u32 2, %s24
      $region56: #{attention_gate_pallas.1} parent=43 // pred_fallthru
        _
    $region44: #{attention_gate_pallas.1} parent=5 // pred_fallthru
      _
    %p366 = scmp.le.s32.totalorder 1, %s16
    %p367 = scmp.lt.s32.totalorder %s16, 3
    %p368 = pnand %p366, %p367
    %p369 = pneg %p368
    // Predicated region
    $region57: #{attention_gate_pallas.1} parent=5 // pred_check
      _
    $region58: #{attention_gate_pallas.1} parent=5 // pred_check_branch
      %371 = sbr.rel (%p368) target = $region60
    $region59: #{attention_gate_pallas.1} parent=5 // pred_region
      %s372 = ssub.s32 %s16, 1
      %s373 = smul.u32 2, %s26
      %p374 = scmp.lt.s32.totalorder %s25, 1
      %s375 = scalar_select %p374, %s25, 1
      %p376 = scmp.lt.s32.totalorder %s373, 1
      %s377 = scalar_select %p376, %s373, 1
      %s378 = smul.addr %s375, 2
      %s379 = sadd.s32 %s377, %s378
      %s380 = smul.addr %s379, 8
      %s381 = scalar_lea.vmem %s0, %s380
      %p382 = pneg %p56
      %p383 = pneg %p53
      %s384 = smul.u32 2, %s26
      %p385 = scmp.lt.s32.totalorder %s25, 1
      %s386 = scalar_select %p385, %s25, 1
      %p387 = scmp.lt.s32.totalorder %s384, 1
      %s388 = scalar_select %p387, %s384, 1
      %s389 = smul.addr %s386, 2
      %s390 = sadd.s32 %s388, %s389
      %s391 = smul.addr %s390, 8
      %s392 = scalar_lea.vmem %s1, %s391
      %p393 = pneg %p84
      %p394 = pneg %p81
      %s395 = smul.u32 2, %s26
      %p396 = scmp.lt.s32.totalorder %s25, 1
      %s397 = scalar_select %p396, %s25, 1
      %p398 = scmp.lt.s32.totalorder %s395, 1
      %s399 = scalar_select %p398, %s395, 1
      %s400 = smul.addr %s397, 2
      %s401 = sadd.s32 %s399, %s400
      %s402 = smul.addr %s401, 4
      %s403 = scalar_lea.vmem %s2, %s402
      %p404 = pneg %p112
      %p405 = pneg %p109
      %p406 = pneg %p133
      %p407 = pneg %p130
      %p408 = pneg %p154
      %p409 = pneg %p151
      %p410 = pneg %p175
      %p411 = pneg %p172
      %p412 = pneg %p196
      %p413 = pneg %p193
      %p414 = pneg %p217
      %p415 = pneg %p214
      %p416 = pneg %p238
      %p417 = pneg %p235
      %p418 = pneg %p259
      %p419 = pneg %p256
      %p420 = pneg %p287
      %p421 = pneg %p284
      %s422 = smul.u32 2, %s26
      %p423 = scmp.lt.s32.totalorder %s25, 1
      %s424 = scalar_select %p423, %s25, 1
      %p425 = scmp.lt.s32.totalorder %s422, 1
      %s426 = scalar_select %p425, %s422, 1
      %s427 = smul.addr %s424, 2
      %s428 = sadd.s32 %s426, %s427
      %s429 = smul.addr %s428, 4
      %s430 = scalar_lea.vmem %s10, %s429
      %s431 = smul.u32 2, %s26
      %p432 = scmp.lt.s32.totalorder %s25, 1
      %s433 = scalar_select %p432, %s25, 1
      %p434 = scmp.lt.s32.totalorder %s431, 1
      %s435 = scalar_select %p434, %s431, 1
      %s436 = smul.addr %s433, 2
      %s437 = sadd.s32 %s435, %s436
      %s438 = smul.addr %s437, 8
      %s439 = scalar_lea.vmem %s0, %s438
      %s440 = smul.u32 2, %s26
      %s441 = smul.u32 2, %s26
      %p442 = scmp.lt.s32.totalorder %s25, 1
      %s443 = scalar_select %p442, %s25, 1
      %p444 = scmp.lt.s32.totalorder %s441, 1
      %s445 = scalar_select %p444, %s441, 1
      %s446 = smul.addr %s443, 2
      %s447 = sadd.s32 %s445, %s446
      %s448 = smul.addr %s447, 8
      %s449 = scalar_lea.vmem %s1, %s448
      %s450 = smul.u32 2, %s26
      %s451 = smul.u32 2, %s26
      %p452 = scmp.lt.s32.totalorder %s25, 1
      %s453 = scalar_select %p452, %s25, 1
      %p454 = scmp.lt.s32.totalorder %s451, 1
      %s455 = scalar_select %p454, %s451, 1
      %s456 = smul.addr %s453, 2
      %s457 = sadd.s32 %s455, %s456
      %s458 = smul.addr %s457, 4
      %s459 = scalar_lea.vmem %s2, %s458
      %s460 = smul.u32 2, %s26
      %s461 = smul.u32 2, %s26
      %p462 = scmp.lt.s32.totalorder %s25, 1
      %s463 = scalar_select %p462, %s25, 1
      %p464 = scmp.lt.s32.totalorder %s461, 1
      %s465 = scalar_select %p464, %s461, 1
      %s466 = smul.addr %s463, 2
      %s467 = sadd.s32 %s465, %s466
      %s468 = smul.addr %s467, 4
      %s469 = scalar_lea.vmem %s10, %s468
      %s470 = smul.u32 2, %s26
      %v471 = vld [vmem:[%s3] sm:$0xff]
      %v472 = vld [vmem:[%s3 + $0x8] sm:$0xff]
      %v473 = vld [vmem:[%s4] sm:$0xff]
      %v474 = vld [vmem:[%s4 + $0x8] sm:$0xff]
      %v475 = vld [vmem:[%s4 + $0x10] sm:$0xff]
      %v476 = vld [vmem:[%s4 + $0x18] sm:$0xff]
      %v477 = vld [vmem:[%s4 + $0x20] sm:$0xf]
      %v478 = vld [vmem:[%s5] sm:$0xff]
      %v479 = vld [vmem:[%s5 + $0x8] sm:$0xff]
      %v480 = vld [vmem:[%s5 + $0x10] sm:$0xf]
      %v481 = vld [vmem:[%s6] sm:$0xff]
      %v482 = vld [vmem:[%s6 + $0x8] sm:$0xff]
      %v483 = vld [vmem:[%s6 + $0x10] sm:$0xff]
      %v484 = vld [vmem:[%s6 + $0x18] sm:$0xff]
      %v485 = vld [vmem:[%s7] sm:$0xff]
      %v486 = vld [vmem:[%s7 + $0x8] sm:$0xff]
      %v487 = vld [vmem:[%s8] sm:$0x3]
      %v488 = vld [vmem:[%s9] sm:$0xf]
      %v489 = vld [vmem:[%s439] sm:$0x3f]
      %v490 = vld [vmem:[%s439 + $0x8] sm:$0x3f]
      %v491 = vld [vmem:[%s449] sm:$0xff]
      %v492 = vld [vmem:[%s449 + $0x8] sm:$0xff]
      %v493 = vld [vmem:[%s459] sm:$0xff]
      %vm494 = vcmask 64512
      %v496 = vsel %vm494, %v473, 0
      %v499 = vsel %vm494, %v474, 0
      %v502 = vsel %vm494, %v475, 0
      %v505 = vsel %vm494, %v476, 0
      %v508 = vsel %vm494, %v477, 0
      %510 = vmatpush.msra.mxu0 0.0
      %511 = vmatpush.msra.mxu0 0.0
      %512 = vmatpush.msra.mxu0 0.0
      %513 = vmatpush.msra.mxu0 0.0
      %514 = vmatpush.msra.mxu0 0.0
      %515 = vmatpush.msra.mxu0 0.0
      %516 = vmatpush.msra.mxu0 0.0
      %517 = vmatpush.msra.mxu0 0.0
      %518 = vmatpush.msra.mxu0 0.0
      %519 = vmatpush.msra.mxu0 0.0
      %520 = vmatpush.msra.mxu0 0.0
      %521 = vmatpush.msra.mxu0 0.0
      %522 = vmatpush.msra.mxu0 0.0
      %523 = vmatpush.msra.mxu0 0.0
      %524 = vmatpush.msra.mxu0 0.0
      %525 = vmatpush.msra.mxu0 %v491
      %526 = vmatmul.f32.gmra.mxu0 %v496
      %v527 = vpop.f32.mrf.mxu0
      %v528 = vadd.f32 0.0, %v527
      %529 = vmatmul.f32.gmra.mxu0 %v499
      %v530 = vpop.f32.mrf.mxu0
      %v531 = vadd.f32 0.0, %v530
      %532 = vmatmul.f32.gmra.mxu0 %v502
      %v533 = vpop.f32.mrf.mxu0
      %v534 = vadd.f32 0.0, %v533
      %535 = vmatmul.f32.gmra.mxu0 %v505
      %v536 = vpop.f32.mrf.mxu0
      %v537 = vadd.f32 0.0, %v536
      %538 = vmatmul.f32.gmra.mxu0 %v508
      %v539 = vpop.f32.mrf.mxu0
      %v540 = vadd.f32 0.0, %v539
      %541 = vdwg.mxu0
      %542 = vmatpush.msra.mxu0 0.0
      %543 = vmatpush.msra.mxu0 0.0
      %544 = vmatpush.msra.mxu0 0.0
      %545 = vmatpush.msra.mxu0 0.0
      %546 = vmatpush.msra.mxu0 0.0
      %547 = vmatpush.msra.mxu0 0.0
      %548 = vmatpush.msra.mxu0 0.0
      %549 = vmatpush.msra.mxu0 0.0
      %550 = vmatpush.msra.mxu0 0.0
      %551 = vmatpush.msra.mxu0 0.0
      %552 = vmatpush.msra.mxu0 0.0
      %553 = vmatpush.msra.mxu0 0.0
      %554 = vmatpush.msra.mxu0 0.0
      %555 = vmatpush.msra.mxu0 0.0
      %556 = vmatpush.msra.mxu0 0.0
      %557 = vmatpush.msra.mxu0 %v492
      %558 = vmatmul.f32.gmra.mxu0 %v496
      %v559 = vpop.f32.mrf.mxu0
      %v560 = vadd.f32 0.0, %v559
      %561 = vmatmul.f32.gmra.mxu0 %v499
      %v562 = vpop.f32.mrf.mxu0
      %v563 = vadd.f32 0.0, %v562
      %564 = vmatmul.f32.gmra.mxu0 %v502
      %v565 = vpop.f32.mrf.mxu0
      %v566 = vadd.f32 0.0, %v565
      %567 = vmatmul.f32.gmra.mxu0 %v505
      %v568 = vpop.f32.mrf.mxu0
      %v569 = vadd.f32 0.0, %v568
      %570 = vmatmul.f32.gmra.mxu0 %v508
      %v571 = vpop.f32.mrf.mxu0
      %v572 = vadd.f32 0.0, %v571
      %573 = vdwg.mxu0
      %575 = vst [vmem:[#allocation1] ss:$2 sm:$0xff] %v493
      %v576 = vld.sshfl [vmem:[#allocation1] sm:$0xff pattern:$0x75316420]
      %v577 = vld.sshfl [vmem:[#allocation1 + $0x8] sm:$0xff pattern:$0x75316420]
      %vm578 = vcmask 31744
      %v580 = vsel %vm578, %v478, 0
      %v583 = vsel %vm578, %v479, 0
      %v586 = vsel %vm578, %v480, 0
      %vm588 = vcmask 1043456
      %v589 = vsel %vm588, %v576, 0
      %v591 = vsel %vm588, %v577, 0
      %593 = vmatpush.msra.mxu0 0.0
      %594 = vmatpush.msra.mxu0 0.0
      %595 = vmatpush.msra.mxu0 0.0
      %596 = vmatpush.msra.mxu0 0.0
      %597 = vmatpush.msra.mxu0 0.0
      %598 = vmatpush.msra.mxu0 0.0
      %599 = vmatpush.msra.mxu0 0.0
      %600 = vmatpush.msra.mxu0 0.0
      %601 = vmatpush.msra.mxu0 0.0
      %602 = vmatpush.msra.mxu0 0.0
      %603 = vmatpush.msra.mxu0 0.0
      %604 = vmatpush.msra.mxu0 0.0
      %605 = vmatpush.msra.mxu0 0.0
      %606 = vmatpush.msra.mxu0 0.0
      %607 = vmatpush.msra.mxu0 0.0
      %608 = vmatpush.msra.mxu0 %v589
      %609 = vmatmul.f32.gmra.mxu0 %v580
      %v610 = vpop.f32.mrf.mxu0
      %v611 = vadd.f32 0.0, %v610
      %612 = vmatmul.f32.gmra.mxu0 %v583
      %v613 = vpop.f32.mrf.mxu0
      %v614 = vadd.f32 0.0, %v613
      %615 = vmatmul.f32.gmra.mxu0 %v586
      %v616 = vpop.f32.mrf.mxu0
      %v617 = vadd.f32 0.0, %v616
      %618 = vdwg.mxu0
      %619 = vmatpush.msra.mxu0 0.0
      %620 = vmatpush.msra.mxu0 0.0
      %621 = vmatpush.msra.mxu0 0.0
      %622 = vmatpush.msra.mxu0 0.0
      %623 = vmatpush.msra.mxu0 0.0
      %624 = vmatpush.msra.mxu0 0.0
      %625 = vmatpush.msra.mxu0 0.0
      %626 = vmatpush.msra.mxu0 0.0
      %627 = vmatpush.msra.mxu0 0.0
      %628 = vmatpush.msra.mxu0 0.0
      %629 = vmatpush.msra.mxu0 0.0
      %630 = vmatpush.msra.mxu0 0.0
      %631 = vmatpush.msra.mxu0 0.0
      %632 = vmatpush.msra.mxu0 0.0
      %633 = vmatpush.msra.mxu0 0.0
      %634 = vmatpush.msra.mxu0 %v591
      %635 = vmatmul.f32.gmra.mxu0 %v580
      %v636 = vpop.f32.mrf.mxu0
      %v637 = vadd.f32 0.0, %v636
      %638 = vmatmul.f32.gmra.mxu0 %v583
      %v639 = vpop.f32.mrf.mxu0
      %v640 = vadd.f32 0.0, %v639
      %641 = vmatmul.f32.gmra.mxu0 %v586
      %v642 = vpop.f32.mrf.mxu0
      %v643 = vadd.f32 0.0, %v642
      %644 = vdwg.mxu0
      %vm645 = vcmask 48128
      %v647 = vsel %vm645, %v471, 0
      %v650 = vsel %vm645, %v472, 0
      %vm652 = vcmask 1045504
      %v654 = vsel %vm652, %v489, 0
      %v657 = vsel %vm652, %v490, 0
      %659 = vmatpush.msra.mxu0 0.0
      %660 = vmatpush.msra.mxu0 0.0
      %661 = vmatpush.msra.mxu0 0.0
      %662 = vmatpush.msra.mxu0 0.0
      %663 = vmatpush.msra.mxu0 0.0
      %664 = vmatpush.msra.mxu0 0.0
      %665 = vmatpush.msra.mxu0 0.0
      %666 = vmatpush.msra.mxu0 0.0
      %667 = vmatpush.msra.mxu0 0.0
      %668 = vmatpush.msra.mxu0 0.0
      %669 = vmatpush.msra.mxu0 0.0
      %670 = vmatpush.msra.mxu0 0.0
      %671 = vmatpush.msra.mxu0 0.0
      %672 = vmatpush.msra.mxu0 0.0
      %673 = vmatpush.msra.mxu0 0.0
      %674 = vmatpush.msra.mxu0 %v654
      %675 = vmatmul.f32.gmra.mxu0 %v647
      %v676 = vpop.f32.mrf.mxu0
      %v677 = vadd.f32 %v528, %v676
      %678 = vmatmul.f32.gmra.mxu0 %v650
      %v679 = vpop.f32.mrf.mxu0
      %v680 = vadd.f32 %v531, %v679
      %681 = vdwg.mxu0
      %682 = vmatpush.msra.mxu0 0.0
      %683 = vmatpush.msra.mxu0 0.0
      %684 = vmatpush.msra.mxu0 0.0
      %685 = vmatpush.msra.mxu0 0.0
      %686 = vmatpush.msra.mxu0 0.0
      %687 = vmatpush.msra.mxu0 0.0
      %688 = vmatpush.msra.mxu0 0.0
      %689 = vmatpush.msra.mxu0 0.0
      %690 = vmatpush.msra.mxu0 0.0
      %691 = vmatpush.msra.mxu0 0.0
      %692 = vmatpush.msra.mxu0 0.0
      %693 = vmatpush.msra.mxu0 0.0
      %694 = vmatpush.msra.mxu0 0.0
      %695 = vmatpush.msra.mxu0 0.0
      %696 = vmatpush.msra.mxu0 0.0
      %697 = vmatpush.msra.mxu0 %v657
      %698 = vmatmul.f32.gmra.mxu0 %v647
      %v699 = vpop.f32.mrf.mxu0
      %v700 = vadd.f32 %v560, %v699
      %701 = vmatmul.f32.gmra.mxu0 %v650
      %v702 = vpop.f32.mrf.mxu0
      %v703 = vadd.f32 %v563, %v702
      %704 = vdwg.mxu0
      %706 = vset.pattern.permute.xlu0 0
      %707 = vperm.xlu0 %706, %v481
      %v708 = vpop.permute.xlu0 %707
      %711 = vset.pattern.permute.xlu0 0
      %712 = vperm.xlu0 %711, %v482
      %v713 = vpop.permute.xlu0 %712
      %v715 = vadd.f32 %v677, %v708
      %v716 = vadd.f32 %v700, %v708
      %v717 = vadd.f32 %v680, %v713
      %v718 = vadd.f32 %v703, %v713
      %v719 = vmax.f32 %v715, 0.0
      %v720 = vmax.f32 %v716, 0.0
      %v721 = vmax.f32 %v717, 0.0
      %v722 = vmax.f32 %v718, 0.0
      %v723 = vadd.f32 %v534, %v611
      %v724 = vadd.f32 %v566, %v637
      %v725 = vadd.f32 %v537, %v614
      %v726 = vadd.f32 %v569, %v640
      %728 = vset.pattern.permute.xlu0 0
      %729 = vperm.xlu0 %728, %v483
      %v730 = vpop.permute.xlu0 %729
      %733 = vset.pattern.permute.xlu0 0
      %734 = vperm.xlu0 %733, %v484
      %v735 = vpop.permute.xlu0 %734
      %v737 = vadd.f32 %v723, %v730
      %v738 = vadd.f32 %v724, %v730
      %v739 = vadd.f32 %v725, %v735
      %v740 = vadd.f32 %v726, %v735
      %v741 = vmax.f32 %v737, 0.0
      %v742 = vmax.f32 %v738, 0.0
      %v743 = vmax.f32 %v739, 0.0
      %v744 = vmax.f32 %v740, 0.0
      %746 = vset.pattern.permute.xlu0 0
      %747 = vperm.xlu0 %746, %v485
      %v748 = vpop.permute.xlu0 %747
      %751 = vset.pattern.permute.xlu0 0
      %752 = vperm.xlu0 %751, %v486
      %v753 = vpop.permute.xlu0 %752
      %v755 = vmul.f32 %v719, %v748
      %v756 = vmul.f32 %v720, %v748
      %v757 = vmul.f32 %v721, %v753
      %v758 = vmul.f32 %v722, %v753
      %v759 = vadd.f32 %v755, %v757
      %v760 = vrot.slane %v759, 4
      %v761 = vadd.f32 %v759, %v760
      %v762 = vrot.slane %v761, 2
      %v763 = vadd.f32 %v761, %v762
      %v764 = vrot.slane %v763, 1
      %v765 = vadd.f32 %v763, %v764
      %v766 = vadd.f32 %v756, %v758
      %v767 = vrot.slane %v766, 4
      %v768 = vadd.f32 %v766, %v767
      %v769 = vrot.slane %v768, 2
      %v770 = vadd.f32 %v768, %v769
      %v771 = vrot.slane %v770, 1
      %v772 = vadd.f32 %v770, %v771
      %774 = vset.pattern.permute.xlu0 0
      %775 = vperm.xlu0 %774, %v487
      %v776 = vpop.permute.xlu0 %775
      %v778 = vadd.f32 %v765, %v776
      %v779 = vadd.f32 %v772, %v776
      %780 = vset.pattern.permute.xlu0 1
      %781 = vperm.xlu0 %780, %v485
      %v782 = vpop.permute.xlu0 %781
      %784 = vset.pattern.permute.xlu0 1
      %785 = vperm.xlu0 %784, %v486
      %v786 = vpop.permute.xlu0 %785
      %v788 = vmul.f32 %v741, %v782
      %v789 = vmul.f32 %v742, %v782
      %v790 = vmul.f32 %v743, %v786
      %v791 = vmul.f32 %v744, %v786
      %v792 = vadd.f32 %v788, %v790
      %v793 = vrot.slane %v792, 4
      %v794 = vadd.f32 %v792, %v793
      %v795 = vrot.slane %v794, 2
      %v796 = vadd.f32 %v794, %v795
      %v797 = vrot.slane %v796, 1
      %v798 = vadd.f32 %v796, %v797
      %v799 = vadd.f32 %v789, %v791
      %v800 = vrot.slane %v799, 4
      %v801 = vadd.f32 %v799, %v800
      %v802 = vrot.slane %v801, 2
      %v803 = vadd.f32 %v801, %v802
      %v804 = vrot.slane %v803, 1
      %v805 = vadd.f32 %v803, %v804
      %v806 = vadd.f32 %v798, %v776
      %v807 = vadd.f32 %v805, %v776
      %v808 = vsub.f32 0.0, %v778
      %v809 = vsub.f32 0.0, %v779
      %v810 = vmul.f32 %v808, 1.442695
      %v811 = vpow.pop %v810
      %v812 = vmul.f32 %v809, 1.442695
      %v813 = vpow.pop %v812
      %v814 = vadd.f32 %v811, 1.0
      %v815 = vadd.f32 %v813, 1.0
      %v816 = vrcp.pop %v814
      %v817 = vmul.f32 %v814, %v816
      %v818 = vsub.f32 1.0, %v817
      %v819 = vmul.f32 %v816, %v818
      %v820 = vadd.f32 %v816, %v819
      %vm821 = vweird.f32 %v814
      %vm822 = vweird.f32 %v816
      %vm823 = vmor %vm821, %vm822
      %v824 = vsel %vm823, %v816, %v820
      %v825 = vand.u32 2147483647, %v814
      %vm826 = vcmp.eq.f32.partialorder %v825, 8.507059e+37
      %v827 = vand.u32 %v814, 2147483648
      %v828 = vor.u32 1.1754944e-38, %v827
      %v829 = vsel %vm826, %v828, %v824
      %v830 = vmul.f32 1.0, %v829
      %v831 = vrcp.pop %v815
      %v832 = vmul.f32 %v815, %v831
      %v833 = vsub.f32 1.0, %v832
      %v834 = vmul.f32 %v831, %v833
      %v835 = vadd.f32 %v831, %v834
      %vm836 = vweird.f32 %v815
      %vm837 = vweird.f32 %v831
      %vm838 = vmor %vm836, %vm837
      %v839 = vsel %vm838, %v831, %v835
      %v840 = vand.u32 2147483647, %v815
      %vm841 = vcmp.eq.f32.partialorder %v840, 8.507059e+37
      %v842 = vand.u32 %v815, 2147483648
      %v843 = vor.u32 1.1754944e-38, %v842
      %v844 = vsel %vm841, %v843, %v839
      %v845 = vmul.f32 1.0, %v844
      %v846 = vsub.f32 0.0, %v806
      %v847 = vsub.f32 0.0, %v807
      %v848 = vmul.f32 %v846, 1.442695
      %v849 = vpow.pop %v848
      %v850 = vmul.f32 %v847, 1.442695
      %v851 = vpow.pop %v850
      %v852 = vadd.f32 %v849, 1.0
      %v853 = vadd.f32 %v851, 1.0
      %v854 = vrcp.pop %v852
      %v855 = vmul.f32 %v852, %v854
      %v856 = vsub.f32 1.0, %v855
      %v857 = vmul.f32 %v854, %v856
      %v858 = vadd.f32 %v854, %v857
      %vm859 = vweird.f32 %v852
      %vm860 = vweird.f32 %v854
      %vm861 = vmor %vm859, %vm860
      %v862 = vsel %vm861, %v854, %v858
      %v863 = vand.u32 2147483647, %v852
      %vm864 = vcmp.eq.f32.partialorder %v863, 8.507059e+37
      %v865 = vand.u32 %v852, 2147483648
      %v866 = vor.u32 1.1754944e-38, %v865
      %v867 = vsel %vm864, %v866, %v862
      %v868 = vmul.f32 1.0, %v867
      %v869 = vrcp.pop %v853
      %v870 = vmul.f32 %v853, %v869
      %v871 = vsub.f32 1.0, %v870
      %v872 = vmul.f32 %v869, %v871
      %v873 = vadd.f32 %v869, %v872
      %vm874 = vweird.f32 %v853
      %vm875 = vweird.f32 %v869
      %vm876 = vmor %vm874, %vm875
      %v877 = vsel %vm876, %v869, %v873
      %v878 = vand.u32 2147483647, %v853
      %vm879 = vcmp.eq.f32.partialorder %v878, 8.507059e+37
      %v880 = vand.u32 %v853, 2147483648
      %v881 = vor.u32 1.1754944e-38, %v880
      %v882 = vsel %vm879, %v881, %v877
      %v883 = vmul.f32 1.0, %v882
      %v884 = vperm.slane %v830, 0
      %v885 = vperm.slane %v845, 0
      %v886 = vmul.f32 %v540, %v884
      %v887 = vmul.f32 %v572, %v885
      %v888 = vperm.slane %v868, 1
      %v889 = vperm.slane %v883, 1
      %v890 = vmul.f32 %v617, %v888
      %v891 = vmul.f32 %v643, %v889
      %v892 = vadd.f32 %v886, %v890
      %v893 = vadd.f32 %v887, %v891
      %895 = vset.pattern.permute.xlu0 0
      %896 = vperm.xlu0 %895, %v488
      %v897 = vpop.permute.xlu0 %896
      %v899 = vadd.f32 %v892, %v897
      %v900 = vadd.f32 %v893, %v897
      %v903 = vrot.slane %v900, 4
      %v904 = vsel %vm588, %v899, %v903
      %906 = vst [vmem:[%s469] sm:$0xff] %v904
      %s907 = smul.u32 2, %s26
      %p908 = scmp.lt.s32.totalorder %s25, 1
      %s909 = scalar_select %p908, %s25, 1
      %p910 = scmp.lt.s32.totalorder %s907, 1
      %s911 = scalar_select %p910, %s907, 1
      %s912 = smul.addr %s909, 2
      %s913 = sadd.s32 %s911, %s912
      %s914 = smul.addr %s913, 4
      %s915 = scalar_lea.vmem %s10, %s914
      // Predicated region
      $region61: #{attention_gate_pallas.1} parent=59 // pred_check
        %p916 = pneg %p284
      $region62: #{attention_gate_pallas.1} parent=59 // pred_check_branch
        %918 = sbr.rel (%p916) target = $region64
      $region63: #{attention_gate_pallas.1} parent=59 // pred_region
        %s919 = smul.u32 2, %s26
      $region64: #{attention_gate_pallas.1} parent=59 // pred_fallthru
        _
    $region60: #{attention_gate_pallas.1} parent=5 // pred_fallthru
      _
    %p920 = scmp.le.s32.totalorder 2, %s16
    // Predicated region
    $region65: #{attention_gate_pallas.1} parent=5 // pred_check
      %p921 = pneg %p920
    $region66: #{attention_gate_pallas.1} parent=5 // pred_check_branch
      %923 = sbr.rel (%p921) target = $region68
    $region67: #{attention_gate_pallas.1} parent=5 // pred_region
      %s924 = ssub.s32 %s16, 2
      // Predicated region
      $region69: #{attention_gate_pallas.1} parent=67 // pred_check
        %p925 = pneg %p290
      $region70: #{attention_gate_pallas.1} parent=67 // pred_check_branch
        %927 = sbr.rel (%p925) target = $region72
      $region71: #{attention_gate_pallas.1} parent=67 // pred_region
        %s928 = smul.u32 2, %s28
        %p929 = scmp.lt.s32.totalorder %s27, 1
        %s930 = scalar_select %p929, %s27, 1
        %p931 = scmp.lt.s32.totalorder %s928, 1
        %s932 = scalar_select %p931, %s928, 1
        %s933 = smul.addr %s930, 2
        %s934 = sadd.s32 %s932, %s933
        %s935 = smul.addr %s934, 4
        %s936 = scalar_lea.vmem %s10, %s935
      $region72: #{attention_gate_pallas.1} parent=67 // pred_fallthru
        _
    $region68: #{attention_gate_pallas.1} parent=5 // pred_fallthru
      _
  $region6: #{attention_gate_pallas.1} parent=0 // loop_footer
    %s20 = sadd.s32 1, %s16
  $region7: #{attention_gate_pallas.1} parent=0 // loop_footer_branch
    %15 = sbr.rel target = $region3
  $region8: #{attention_gate_pallas.1} parent=0 // loop_exit
    _

</llo_original>
